<compile_context>
chip_gen: v6e
topology: v6e:2x2x1
jax: 0.10.0
libtpu: 0.0.40
codegen_flags: <defaults>
</compile_context>

<pallas_src>
import functools

import jax
import jax.numpy as jnp
from jax.experimental import pallas as pl
from jax.experimental.pallas import tpu as pltpu


def _leaky_relu(x, slope=0.01):
    return jnp.where(x > 0, x, slope * x)


def classifier_kernel(x_ref,
                      w1_ref, t1_ref,
                      w2_ref, t2_ref,
                      w3_ref, t3_ref,
                      w4_ref, b4_ref,
                      out_ref,
                      *, bf16_activations=False):
    """Fused forward: 3x (bf16 matmul -> +shift -> leaky_relu) + padded final matmul."""
    bf16 = jnp.bfloat16

    x = x_ref[...]
    if x.dtype != bf16:          # trace-time branch; no-op when the producer gives bf16
        x = x.astype(bf16)

    def layer(h, w_ref, t_ref):
        a = jnp.dot(h, w_ref[...], preferred_element_type=jnp.float32)
        if bf16_activations:
            # bf16 affine + leaky_relu (v6e/v7x): halves intermediate live footprint.
            a = a.astype(bf16) + t_ref[...].astype(bf16)
            return _leaky_relu(a)
        # f32 affine + leaky_relu (safe on v5e: no bf16 VALU there).
        a = _leaky_relu(a + t_ref[...])
        return a.astype(bf16)

    # Layers 1-3: fc (BN scale folded into W) -> +t -> leaky_relu  (dropout = identity)
    h = layer(x, w1_ref, t1_ref)
    h = layer(h, w2_ref, t2_ref)
    h = layer(h, w3_ref, t3_ref)

    # Layer 4: fc4 (lane-padded to 128 output columns -> unmasked lane-dense store).
    out = jnp.dot(h, w4_ref[...], preferred_element_type=jnp.float32)
    out_ref[...] = (out + b4_ref[...]).astype(out_ref.dtype)


def _batch_dim_semantics():
    """CORE_PARALLEL on 2-TC chips (v7x) so the batch grid shards across both cores;
    plain "parallel" elsewhere (v5e/v6e have a single TensorCore)."""
    try:
        kind = jax.devices()[0].device_kind.lower()
    except Exception:
        return ("parallel",)
    if "7" in kind:              # e.g. "TPU v7x" / "TPU7x"
        return (pltpu.CORE_PARALLEL,)
    return ("parallel",)


def classifier_forward(x, params, *, out_size=4, max_tile_b=1024,
                       out_dtype=jnp.bfloat16, bf16_activations=False):
    """x: (B, input_size) bf16 or f32. params: dict produced by init_params.

    Returns (B, out_size) float32 logits.
    """
    B, d_in = x.shape
    h1 = params["w1"].shape[1]
    h2 = params["w2"].shape[1]
    h3 = params["w3"].shape[1]
    out_pad = params["w4"].shape[1]

    # Batch tiling without any wrapper-side jnp.pad:
    #   B <= max_tile_b : single full-extent block (always legal, any B).
    #   B >  max_tile_b : 1024-row tiles; Pallas clips the ragged last block.
    if B <= max_tile_b:
        tile_b = B
    else:
        tile_b = max_tile_b      # multiple of 16 (bf16 sublane packing)
    grid_b = pl.cdiv(B, tile_b)

    args = (x,
            params["w1"], params["t1"],
            params["w2"], params["t2"],
            params["w3"], params["t3"],
            params["w4"], params["b4"])

    def resident(a):
        # Constant index_map -> weight/shift stays in VMEM across grid steps.
        return pl.BlockSpec(a.shape, lambda i: (0, 0))

    param_bytes = sum(int(a.size) * a.dtype.itemsize for a in args[1:])
    flops = 2 * B * (d_in * h1 + h1 * h2 + h2 * h3 + h3 * out_pad)
    bytes_accessed = (B * d_in * x.dtype.itemsize
                      + B * out_pad * jnp.dtype(out_dtype).itemsize
                      + param_bytes)

    kernel = functools.partial(classifier_kernel, bf16_activations=bf16_activations)

    y = pl.pallas_call(
        kernel,
        out_shape=jax.ShapeDtypeStruct((B, out_pad), out_dtype),
        grid=(grid_b,),
        in_specs=[pl.BlockSpec((tile_b, d_in), lambda i: (i, 0))]
                 + [resident(a) for a in args[1:]],
        out_specs=pl.BlockSpec((tile_b, out_pad), lambda i: (i, 0)),
        compiler_params=pltpu.CompilerParams(
            dimension_semantics=_batch_dim_semantics(),
            vmem_limit_bytes=32 * 1024 * 1024,
        ),
        cost_estimate=pl.CostEstimate(
            flops=flops, transcendentals=0, bytes_accessed=bytes_accessed),
    )(*args)

    # Tiny (B, 4) slice + cast back to f32 (negligible vs the kernel's traffic).
    return y[:, :out_size].astype(jnp.float32)


def init_params(key, input_size=128, hidden_size=256, output_size=4, out_pad=128):
    """Deterministic synthetic parameters matching ClassifierModel shapes.

    BatchNorm running stats are the PyTorch init values (mean=0, var=1);
    gamma/beta are drawn so the fold is non-trivial.  BN scale is folded into
    the weight matrices; weights are stored transposed ((in, out)) in bf16,
    shifts/biases in f32.  The final layer is zero-padded to `out_pad` columns.
    Note: folding the BN scale into bf16 weights quantizes gamma/sqrt(var+eps)
    along with W (bf16-level difference vs a pure-f32 PyTorch forward).
    """
    eps = 1e-5
    dims = [(input_size, hidden_size),
            (hidden_size, hidden_size),
            (hidden_size, hidden_size // 2),
            (hidden_size // 2, output_size)]
    keys = jax.random.split(key, 16)
    ki = iter(keys)
    params = {}

    for li, (din, dout) in enumerate(dims, start=1):
        bound = 1.0 / jnp.sqrt(din)
        w = jax.random.uniform(next(ki), (din, dout), jnp.float32, -bound, bound)
        b = jax.random.uniform(next(ki), (dout,), jnp.float32, -bound, bound)
        if li < 4:
            gamma = 1.0 + 0.1 * jax.random.normal(next(ki), (dout,), jnp.float32)
            beta = 0.1 * jax.random.normal(next(ki), (dout,), jnp.float32)
            run_mean = jnp.zeros((dout,), jnp.float32)
            run_var = jnp.ones((dout,), jnp.float32)
            s = gamma / jnp.sqrt(run_var + eps)
            t = beta + (b - run_mean) * s
            # Fold BN scale into the weights: (x@W)*s == x@(W*s)
            params[f"w{li}"] = (w * s[None, :]).astype(jnp.bfloat16)
            params[f"t{li}"] = t.reshape(1, dout)
        else:
            w_pad = jnp.zeros((din, out_pad), jnp.float32).at[:, :dout].set(w)
            b_pad = jnp.zeros((1, out_pad), jnp.float32).at[:, :dout].set(b.reshape(1, dout))
            params["w4"] = w_pad.astype(jnp.bfloat16)
            params["b4"] = b_pad
    return params


def reference_forward(x, params, out_size=4, out_dtype=jnp.bfloat16,
                      bf16_activations=False):
    """Plain-JAX reference with precision matched to the kernel."""
    bf16 = jnp.bfloat16
    h = x.astype(bf16)
    for li in (1, 2, 3):
        a = jnp.dot(h, params[f"w{li}"], preferred_element_type=jnp.float32)
        if bf16_activations:
            a = a.astype(bf16) + params[f"t{li}"].astype(bf16)
            h = jnp.where(a > 0, a, 0.01 * a)
        else:
            a = a + params[f"t{li}"]
            a = jnp.where(a > 0, a, 0.01 * a)
            h = a.astype(bf16)
    out = jnp.dot(h, params["w4"], preferred_element_type=jnp.float32) + params["b4"]
    out = out.astype(out_dtype)
    return out[:, :out_size].astype(jnp.float32)


if __name__ == "__main__":
    key = jax.random.PRNGKey(0)
    pkey, xkey = jax.random.split(key)

    B, INPUT, HIDDEN, OUT = 8, 128, 256, 4
    params = init_params(pkey, INPUT, HIDDEN, OUT)
    # Demo data generation: the upstream producer (VAE encoder) supplies bf16 latents,
    # which halves the kernel's HBM input read vs f32.  (f32 x is also accepted.)
    x = jax.random.normal(xkey, (B, INPUT), jnp.float32).astype(jnp.bfloat16)

    y = classifier_forward(x, params, out_size=OUT)
    y = jax.block_until_ready(y)

    y_ref = reference_forward(x, params, OUT)
    assert y.shape == (B, OUT)
    assert jnp.allclose(y, y_ref, atol=2e-2, rtol=2e-2), float(jnp.max(jnp.abs(y - y_ref)))

    print("KERNEL_OK")
</pallas_src>

<mosaic_0001>
module attributes {stable_mosaic.version = 11 : i64} {
  func.func @classifier_kernel(%arg0: i32, %arg1: memref<8x128xbf16, #tpu.memory_space<vmem>>, %arg2: memref<128x256xbf16, #tpu.memory_space<vmem>>, %arg3: memref<1x256xf32, #tpu.memory_space<vmem>>, %arg4: memref<256x256xbf16, #tpu.memory_space<vmem>>, %arg5: memref<1x256xf32, #tpu.memory_space<vmem>>, %arg6: memref<256x128xbf16, #tpu.memory_space<vmem>>, %arg7: memref<1x128xf32, #tpu.memory_space<vmem>>, %arg8: memref<128x128xbf16, #tpu.memory_space<vmem>>, %arg9: memref<1x128xf32, #tpu.memory_space<vmem>>, %arg10: memref<8x128xbf16, #tpu.memory_space<vmem>>) attributes {dimension_semantics = [#tpu.dimension_semantics<parallel>], iteration_bounds = array<i64: 1>, scalar_prefetch = 0 : i64, scratch_operands = 0 : i64, tpu.core_type = #tpu.core_type<tc>, window_params = [{transform_indices = @transform_0, window_bounds = array<i64: 8, 128>}, {pipeline_mode = #tpu.pipeline_mode<synchronous>, transform_indices = @transform_1, window_bounds = array<i64: 128, 256>}, {pipeline_mode = #tpu.pipeline_mode<synchronous>, transform_indices = @transform_2, window_bounds = array<i64: 1, 256>}, {pipeline_mode = #tpu.pipeline_mode<synchronous>, transform_indices = @transform_3, window_bounds = array<i64: 256, 256>}, {pipeline_mode = #tpu.pipeline_mode<synchronous>, transform_indices = @transform_4, window_bounds = array<i64: 1, 256>}, {pipeline_mode = #tpu.pipeline_mode<synchronous>, transform_indices = @transform_5, window_bounds = array<i64: 256, 128>}, {pipeline_mode = #tpu.pipeline_mode<synchronous>, transform_indices = @transform_6, window_bounds = array<i64: 1, 128>}, {pipeline_mode = #tpu.pipeline_mode<synchronous>, transform_indices = @transform_7, window_bounds = array<i64: 128, 128>}, {pipeline_mode = #tpu.pipeline_mode<synchronous>, transform_indices = @transform_8, window_bounds = array<i64: 1, 128>}, {transform_indices = @transform_9, window_bounds = array<i64: 8, 128>}]} {
    %c0 = arith.constant 0 : index
    %c0_0 = arith.constant 0 : index
    %0 = vector.load %arg1[%c0, %c0_0] : memref<8x128xbf16, #tpu.memory_space<vmem>>, vector<8x128xbf16>
    %c0_1 = arith.constant 0 : index
    %c0_2 = arith.constant 0 : index
    %1 = vector.load %arg2[%c0_1, %c0_2] : memref<128x256xbf16, #tpu.memory_space<vmem>>, vector<128x256xbf16>
    %cst = arith.constant dense<0.000000e+00> : vector<8x256xf32>
    %2 = tpu.matmul %0, %1, %cst {dimension_numbers = #tpu.dot_dimension_numbers<[1], [0], [0], [1], [0, 0, 1, 1], [], []>} : vector<8x128xbf16>, vector<128x256xbf16>, vector<8x256xf32> -> vector<8x256xf32>
    %c0_3 = arith.constant 0 : index
    %c0_4 = arith.constant 0 : index
    %3 = vector.load %arg3[%c0_3, %c0_4] : memref<1x256xf32, #tpu.memory_space<vmem>>, vector<1x256xf32>
    %4 = vector.broadcast %3 : vector<1x256xf32> to vector<8x256xf32>
    %5 = arith.addf %2, %4 : vector<8x256xf32>
    %cst_5 = arith.constant 0.000000e+00 : f32
    %6 = vector.broadcast %cst_5 : f32 to vector<8x256xf32>
    %7 = arith.cmpf ogt, %5, %6 : vector<8x256xf32>
    %cst_6 = arith.constant 0.00999999977 : f32
    %8 = vector.broadcast %cst_6 : f32 to vector<8x256xf32>
    %9 = arith.mulf %8, %5 : vector<8x256xf32>
    %10 = arith.select %7, %5, %9 : vector<8x256xi1>, vector<8x256xf32>
    %11 = arith.truncf %10 : vector<8x256xf32> to vector<8x256xbf16>
    %c0_7 = arith.constant 0 : index
    %c0_8 = arith.constant 0 : index
    %12 = vector.load %arg4[%c0_7, %c0_8] : memref<256x256xbf16, #tpu.memory_space<vmem>>, vector<256x256xbf16>
    %cst_9 = arith.constant dense<0.000000e+00> : vector<8x256xf32>
    %13 = tpu.matmul %11, %12, %cst_9 {dimension_numbers = #tpu.dot_dimension_numbers<[1], [0], [0], [1], [0, 0, 1, 1], [], []>} : vector<8x256xbf16>, vector<256x256xbf16>, vector<8x256xf32> -> vector<8x256xf32>
    %c0_10 = arith.constant 0 : index
    %c0_11 = arith.constant 0 : index
    %14 = vector.load %arg5[%c0_10, %c0_11] : memref<1x256xf32, #tpu.memory_space<vmem>>, vector<1x256xf32>
    %15 = vector.broadcast %14 : vector<1x256xf32> to vector<8x256xf32>
    %16 = arith.addf %13, %15 : vector<8x256xf32>
    %cst_12 = arith.constant 0.000000e+00 : f32
    %17 = vector.broadcast %cst_12 : f32 to vector<8x256xf32>
    %18 = arith.cmpf ogt, %16, %17 : vector<8x256xf32>
    %cst_13 = arith.constant 0.00999999977 : f32
    %19 = vector.broadcast %cst_13 : f32 to vector<8x256xf32>
    %20 = arith.mulf %19, %16 : vector<8x256xf32>
    %21 = arith.select %18, %16, %20 : vector<8x256xi1>, vector<8x256xf32>
    %22 = arith.truncf %21 : vector<8x256xf32> to vector<8x256xbf16>
    %c0_14 = arith.constant 0 : index
    %c0_15 = arith.constant 0 : index
    %23 = vector.load %arg6[%c0_14, %c0_15] : memref<256x128xbf16, #tpu.memory_space<vmem>>, vector<256x128xbf16>
    %cst_16 = arith.constant dense<0.000000e+00> : vector<8x128xf32>
    %24 = tpu.matmul %22, %23, %cst_16 {dimension_numbers = #tpu.dot_dimension_numbers<[1], [0], [0], [1], [0, 0, 1, 1], [], []>} : vector<8x256xbf16>, vector<256x128xbf16>, vector<8x128xf32> -> vector<8x128xf32>
    %c0_17 = arith.constant 0 : index
    %c0_18 = arith.constant 0 : index
    %25 = vector.load %arg7[%c0_17, %c0_18] : memref<1x128xf32, #tpu.memory_space<vmem>>, vector<1x128xf32>
    %26 = vector.broadcast %25 : vector<1x128xf32> to vector<8x128xf32>
    %27 = arith.addf %24, %26 : vector<8x128xf32>
    %cst_19 = arith.constant 0.000000e+00 : f32
    %28 = vector.broadcast %cst_19 : f32 to vector<8x128xf32>
    %29 = arith.cmpf ogt, %27, %28 : vector<8x128xf32>
    %cst_20 = arith.constant 0.00999999977 : f32
    %30 = vector.broadcast %cst_20 : f32 to vector<8x128xf32>
    %31 = arith.mulf %30, %27 : vector<8x128xf32>
    %32 = arith.select %29, %27, %31 : vector<8x128xi1>, vector<8x128xf32>
    %33 = arith.truncf %32 : vector<8x128xf32> to vector<8x128xbf16>
    %c0_21 = arith.constant 0 : index
    %c0_22 = arith.constant 0 : index
    %34 = vector.load %arg8[%c0_21, %c0_22] : memref<128x128xbf16, #tpu.memory_space<vmem>>, vector<128x128xbf16>
    %cst_23 = arith.constant dense<0.000000e+00> : vector<8x128xf32>
    %35 = tpu.matmul %33, %34, %cst_23 {dimension_numbers = #tpu.dot_dimension_numbers<[1], [0], [0], [1], [0, 0, 1, 1], [], []>} : vector<8x128xbf16>, vector<128x128xbf16>, vector<8x128xf32> -> vector<8x128xf32>
    %c0_24 = arith.constant 0 : index
    %c0_25 = arith.constant 0 : index
    %36 = vector.load %arg9[%c0_24, %c0_25] : memref<1x128xf32, #tpu.memory_space<vmem>>, vector<1x128xf32>
    %37 = vector.broadcast %36 : vector<1x128xf32> to vector<8x128xf32>
    %38 = arith.addf %35, %37 : vector<8x128xf32>
    %39 = arith.truncf %38 : vector<8x128xf32> to vector<8x128xbf16>
    %c0_26 = arith.constant 0 : index
    %c0_27 = arith.constant 0 : index
    %40 = vector.load %arg10[%c0_26, %c0_27] : memref<8x128xbf16, #tpu.memory_space<vmem>>, vector<8x128xbf16>
    tpu.vector_store %arg10[%c0_26, %c0_27], %39 {strides = array<i32>} : memref<8x128xbf16, #tpu.memory_space<vmem>>, vector<8x128xbf16>,
    return
  }
  func.func @transform_0(%arg0: i32) -> (i32, i32) {
    %c0_i32 = arith.constant 0 : i32
    %c0_i32_0 = arith.constant 0 : i32
    return %arg0, %c0_i32 : i32, i32
  }
  func.func @transform_1(%arg0: i32) -> (i32, i32) {
    %c0_i32 = arith.constant 0 : i32
    %c0_i32_0 = arith.constant 0 : i32
    %c0_i32_1 = arith.constant 0 : i32
    return %c0_i32, %c0_i32_0 : i32, i32
  }
  func.func @transform_2(%arg0: i32) -> (i32, i32) {
    %c0_i32 = arith.constant 0 : i32
    %c0_i32_0 = arith.constant 0 : i32
    %c0_i32_1 = arith.constant 0 : i32
    return %c0_i32, %c0_i32_0 : i32, i32
  }
  func.func @transform_3(%arg0: i32) -> (i32, i32) {
    %c0_i32 = arith.constant 0 : i32
    %c0_i32_0 = arith.constant 0 : i32
    %c0_i32_1 = arith.constant 0 : i32
    return %c0_i32, %c0_i32_0 : i32, i32
  }
  func.func @transform_4(%arg0: i32) -> (i32, i32) {
    %c0_i32 = arith.constant 0 : i32
    %c0_i32_0 = arith.constant 0 : i32
    %c0_i32_1 = arith.constant 0 : i32
    return %c0_i32, %c0_i32_0 : i32, i32
  }
  func.func @transform_5(%arg0: i32) -> (i32, i32) {
    %c0_i32 = arith.constant 0 : i32
    %c0_i32_0 = arith.constant 0 : i32
    %c0_i32_1 = arith.constant 0 : i32
    return %c0_i32, %c0_i32_0 : i32, i32
  }
  func.func @transform_6(%arg0: i32) -> (i32, i32) {
    %c0_i32 = arith.constant 0 : i32
    %c0_i32_0 = arith.constant 0 : i32
    %c0_i32_1 = arith.constant 0 : i32
    return %c0_i32, %c0_i32_0 : i32, i32
  }
  func.func @transform_7(%arg0: i32) -> (i32, i32) {
    %c0_i32 = arith.constant 0 : i32
    %c0_i32_0 = arith.constant 0 : i32
    %c0_i32_1 = arith.constant 0 : i32
    return %c0_i32, %c0_i32_0 : i32, i32
  }
  func.func @transform_8(%arg0: i32) -> (i32, i32) {
    %c0_i32 = arith.constant 0 : i32
    %c0_i32_0 = arith.constant 0 : i32
    %c0_i32_1 = arith.constant 0 : i32
    return %c0_i32, %c0_i32_0 : i32, i32
  }
  func.func @transform_9(%arg0: i32) -> (i32, i32) {
    %c0_i32 = arith.constant 0 : i32
    %c0_i32_0 = arith.constant 0 : i32
    return %arg0, %c0_i32 : i32, i32
  }
}

</mosaic_0001>

<llo_original>
// kernel: tpu_custom_call.1
$region0: #{tpu_custom_call.1}
  #allocation0 [shape = 'u32[]', space=smem, size = 0x4, offset = 0x4, fixed_abs, tag = 'smem constant byte address 0x4 - core index']
  #allocation1 [shape = 'u32[144,128]{1,0:T(1,128)}', space=vmem, size = 0x12000, scoped, tag = 'internal scratch']
  %s0 = inlined_call_operand.hbm [shape: bf16[8,128], index: 0, kind: input, shape index: {}]
  %s1 = inlined_call_operand.hbm [shape: bf16[128,256], index: 1, kind: input, shape index: {}]
  %s2 = inlined_call_operand.vmem [shape: f32[1,256], index: 2, kind: input, shape index: {}]
  %s3 = inlined_call_operand.hbm [shape: bf16[256,256], index: 3, kind: input, shape index: {}]
  %s4 = inlined_call_operand.vmem [shape: f32[1,256], index: 4, kind: input, shape index: {}]
  %s5 = inlined_call_operand.hbm [shape: bf16[256,128], index: 5, kind: input, shape index: {}]
  %s6 = inlined_call_operand.vmem [shape: f32[1,128], index: 6, kind: input, shape index: {}]
  %s7 = inlined_call_operand.hbm [shape: bf16[128,128], index: 7, kind: input, shape index: {}]
  %s8 = inlined_call_operand.vmem [shape: f32[1,128], index: 8, kind: input, shape index: {}]
  %s9 = inlined_call_operand.hbm [shape: bf16[8,128], index: 9, kind: output, shape index: {}]
  %s10 = sld [smem:[#allocation0]]
  $region66: #{tpu_custom_call.1} parent=0
    _
  %s12 = ssub.s32 1, %s10
  %s13 = scalar_select 0, %s12, %s10
  $region1: #{tpu_custom_call.1} parent=0
    #allocation2 [shape = 'u8[2048]{0}', space=vmem, size = 0x800, scoped, tag = 'input window, operand 0, single buffered']
    #allocation3 [shape = 's32[1]{0}', space=sflag, size = 0x4, scoped, tag = 'scoped memory for tpu_custom_call.1']
    #allocation4 [shape = 's32[1]{0}', space=sflag, size = 0x4, scoped, tag = 'scoped memory for tpu_custom_call.1']
    #allocation5 [shape = 'u8[65536]{0}', space=vmem, size = 0x10000, scoped, tag = 'input window, operand 1, single buffered']
    #allocation6 [shape = 's32[1]{0}', space=sflag, size = 0x4, scoped, tag = 'scoped memory for tpu_custom_call.1']
    #allocation7 [shape = 'u8[131072]{0}', space=vmem, size = 0x20000, scoped, tag = 'input window, operand 3, single buffered']
    #allocation8 [shape = 'u8[65536]{0}', space=vmem, size = 0x10000, scoped, tag = 'input window, operand 5, single buffered']
    #allocation9 [shape = 's32[1]{0}', space=sflag, size = 0x4, scoped, tag = 'scoped memory for tpu_custom_call.1']
    #allocation10 [shape = 'u8[32768]{0}', space=vmem, size = 0x8000, scoped, tag = 'input window, operand 7, single buffered']
    #allocation11 [shape = 'u8[2048]{0}', space=vmem, size = 0x800, scoped, tag = 'output window, operand 0, single buffered']
    %14 = vsyncpa [#allocation3], 0
    %15 = vsyncpa [#allocation6], 0
    %16 = vsyncpa [#allocation9], 0
    %17 = vsyncpa [#allocation4], 0
    // Predicated region
    $region2: #{tpu_custom_call.1} parent=1 // pred_check
      _
    $region3: #{tpu_custom_call.1} parent=1 // pred_check_branch
      %19 = sbr.rel (0) target = $region5
    $region4: #{tpu_custom_call.1} parent=1 // pred_region
      %s21 = ssub.s32 64, 64
      %22 = vsyncadd [#allocation3], %s21
      %s24 = sshll.u32 [#allocation2], 4
      %s25 = int_to_ptr.vmem [resolvable:$true] %s24
      %27 = dma.hbm_to_vmem [thread:$0]  %s0, 64, %s25, [#allocation3]
    $region5: #{tpu_custom_call.1} parent=1 // pred_fallthru
      _
    // Predicated region
    $region6: #{tpu_custom_call.1} parent=1 // pred_check
      _
    $region7: #{tpu_custom_call.1} parent=1 // pred_check_branch
      %29 = sbr.rel (0) target = $region9
    $region8: #{tpu_custom_call.1} parent=1 // pred_region
      %s31 = ssub.s32 2048, 2048
      %32 = vsyncadd [#allocation6], %s31
      %s33 = sshll.u32 [#allocation5], 4
      %s34 = int_to_ptr.vmem [resolvable:$true] %s33
      %39 = dma.hbm_to_vmem [thread:$0]  %s1, 2048, %s34, [#allocation6], 128, 128, 8
    $region9: #{tpu_custom_call.1} parent=1 // pred_fallthru
      _
    // Predicated region
    $region10: #{tpu_custom_call.1} parent=1 // pred_check
      _
    $region11: #{tpu_custom_call.1} parent=1 // pred_check_branch
      %41 = sbr.rel (0) target = $region13
    $region12: #{tpu_custom_call.1} parent=1 // pred_region
      _
    $region13: #{tpu_custom_call.1} parent=1 // pred_fallthru
      _
    // Predicated region
    $region14: #{tpu_custom_call.1} parent=1 // pred_check
      _
    $region15: #{tpu_custom_call.1} parent=1 // pred_check_branch
      %43 = sbr.rel (0) target = $region17
    $region16: #{tpu_custom_call.1} parent=1 // pred_region
      %s45 = ssub.s32 4096, 4096
      %46 = vsyncadd [#allocation6], %s45
      %s47 = sshll.u32 [#allocation7], 4
      %s48 = int_to_ptr.vmem [resolvable:$true] %s47
      %53 = dma.hbm_to_vmem [thread:$0]  %s3, 4096, %s48, [#allocation6], 128, 128, 8
    $region17: #{tpu_custom_call.1} parent=1 // pred_fallthru
      _
    // Predicated region
    $region18: #{tpu_custom_call.1} parent=1 // pred_check
      _
    $region19: #{tpu_custom_call.1} parent=1 // pred_check_branch
      %55 = sbr.rel (0) target = $region21
    $region20: #{tpu_custom_call.1} parent=1 // pred_region
      _
    $region21: #{tpu_custom_call.1} parent=1 // pred_fallthru
      _
    // Predicated region
    $region22: #{tpu_custom_call.1} parent=1 // pred_check
      _
    $region23: #{tpu_custom_call.1} parent=1 // pred_check_branch
      %57 = sbr.rel (0) target = $region25
    $region24: #{tpu_custom_call.1} parent=1 // pred_region
      %s59 = ssub.s32 2048, 2048
      %60 = vsyncadd [#allocation9], %s59
      %s61 = sshll.u32 [#allocation8], 4
      %s62 = int_to_ptr.vmem [resolvable:$true] %s61
      %67 = dma.hbm_to_vmem [thread:$0]  %s5, 2048, %s62, [#allocation9], 64, 64, 4
    $region25: #{tpu_custom_call.1} parent=1 // pred_fallthru
      _
    // Predicated region
    $region26: #{tpu_custom_call.1} parent=1 // pred_check
      _
    $region27: #{tpu_custom_call.1} parent=1 // pred_check_branch
      %69 = sbr.rel (0) target = $region29
    $region28: #{tpu_custom_call.1} parent=1 // pred_region
      _
    $region29: #{tpu_custom_call.1} parent=1 // pred_fallthru
      _
    // Predicated region
    $region30: #{tpu_custom_call.1} parent=1 // pred_check
      _
    $region31: #{tpu_custom_call.1} parent=1 // pred_check_branch
      %71 = sbr.rel (0) target = $region33
    $region32: #{tpu_custom_call.1} parent=1 // pred_region
      %s73 = ssub.s32 1024, 1024
      %74 = vsyncadd [#allocation9], %s73
      %s75 = sshll.u32 [#allocation10], 4
      %s76 = int_to_ptr.vmem [resolvable:$true] %s75
      %81 = dma.hbm_to_vmem [thread:$0]  %s7, 1024, %s76, [#allocation9], 64, 64, 4
    $region33: #{tpu_custom_call.1} parent=1 // pred_fallthru
      _
    // Predicated region
    $region34: #{tpu_custom_call.1} parent=1 // pred_check
      _
    $region35: #{tpu_custom_call.1} parent=1 // pred_check_branch
      %83 = sbr.rel (0) target = $region37
    $region36: #{tpu_custom_call.1} parent=1 // pred_region
      _
    $region37: #{tpu_custom_call.1} parent=1 // pred_fallthru
      _
    // Predicated region
    $region38: #{tpu_custom_call.1} parent=1 // pred_check
      _
    $region39: #{tpu_custom_call.1} parent=1 // pred_check_branch
      %85 = sbr.rel (0) target = $region41
    $region40: #{tpu_custom_call.1} parent=1 // pred_region
      %86 = dma.done [#allocation3], 64
    $region41: #{tpu_custom_call.1} parent=1 // pred_fallthru
      _
    // Predicated region
    $region42: #{tpu_custom_call.1} parent=1 // pred_check
      _
    $region43: #{tpu_custom_call.1} parent=1 // pred_check_branch
      %88 = sbr.rel (0) target = $region45
    $region44: #{tpu_custom_call.1} parent=1 // pred_region
      %89 = dma.done [#allocation6], 2048
    $region45: #{tpu_custom_call.1} parent=1 // pred_fallthru
      _
    // Predicated region
    $region46: #{tpu_custom_call.1} parent=1 // pred_check
      _
    $region47: #{tpu_custom_call.1} parent=1 // pred_check_branch
      %91 = sbr.rel (0) target = $region49
    $region48: #{tpu_custom_call.1} parent=1 // pred_region
      %92 = dma.done [#allocation6], 4096
    $region49: #{tpu_custom_call.1} parent=1 // pred_fallthru
      _
    // Predicated region
    $region50: #{tpu_custom_call.1} parent=1 // pred_check
      _
    $region51: #{tpu_custom_call.1} parent=1 // pred_check_branch
      %94 = sbr.rel (0) target = $region53
    $region52: #{tpu_custom_call.1} parent=1 // pred_region
      %95 = dma.done [#allocation9], 2048
    $region53: #{tpu_custom_call.1} parent=1 // pred_fallthru
      _
    // Predicated region
    $region54: #{tpu_custom_call.1} parent=1 // pred_check
      _
    $region55: #{tpu_custom_call.1} parent=1 // pred_check_branch
      %97 = sbr.rel (0) target = $region57
    $region56: #{tpu_custom_call.1} parent=1 // pred_region
      %98 = dma.done [#allocation9], 1024
    $region57: #{tpu_custom_call.1} parent=1 // pred_fallthru
      _
    %v100 = vld [vmem:[#allocation2] sm:$0xf]
    %v101 = vld [vmem:[#allocation5] sm:$0xff]
    %v102 = vld [vmem:[#allocation5 + $0x8] sm:$0xff]
    %v103 = vld [vmem:[#allocation5 + $0x10] sm:$0xff]
    %v104 = vld [vmem:[#allocation5 + $0x18] sm:$0xff]
    %v105 = vld [vmem:[#allocation5 + $0x20] sm:$0xff]
    %v106 = vld [vmem:[#allocation5 + $0x28] sm:$0xff]
    %v107 = vld [vmem:[#allocation5 + $0x30] sm:$0xff]
    %v108 = vld [vmem:[#allocation5 + $0x38] sm:$0xff]
    %v109 = vld [vmem:[#allocation5 + $0x40] sm:$0xff]
    %v110 = vld [vmem:[#allocation5 + $0x48] sm:$0xff]
    %v111 = vld [vmem:[#allocation5 + $0x50] sm:$0xff]
    %v112 = vld [vmem:[#allocation5 + $0x58] sm:$0xff]
    %v113 = vld [vmem:[#allocation5 + $0x60] sm:$0xff]
    %v114 = vld [vmem:[#allocation5 + $0x68] sm:$0xff]
    %v115 = vld [vmem:[#allocation5 + $0x70] sm:$0xff]
    %v116 = vld [vmem:[#allocation5 + $0x78] sm:$0xff]
    %v117 = vld [vmem:[%s2] sm:$0x3]
    %v119 = vlaneseq
    %v120 = vshrl.u32 %v119, 7
    %v121 = vsub.s32 0, %v120
    %v122 = vrot.slane %v117, %v121
    %v123 = vlaneseq
    %v124 = vshrl.u32 %v123, 7
    %v125 = vsub.s32 1, %v124
    %v126 = vrot.slane %v117, %v125
    %v145 = vunpack.c.l.b16 %v101
    %v146 = vunpack.c.h.b16 %v101
    %v147 = vunpack.c.l.b16 %v102
    %v148 = vunpack.c.h.b16 %v102
    %v149 = vunpack.c.l.b16 %v103
    %v150 = vunpack.c.h.b16 %v103
    %v151 = vunpack.c.l.b16 %v104
    %v152 = vunpack.c.h.b16 %v104
    %v153 = vunpack.c.l.b16 %v105
    %v154 = vunpack.c.h.b16 %v105
    %v155 = vunpack.c.l.b16 %v106
    %v156 = vunpack.c.h.b16 %v106
    %v157 = vunpack.c.l.b16 %v107
    %v158 = vunpack.c.h.b16 %v107
    %v159 = vunpack.c.l.b16 %v108
    %v160 = vunpack.c.h.b16 %v108
    %v161 = vunpack.c.l.b16 %v109
    %v162 = vunpack.c.h.b16 %v109
    %v163 = vunpack.c.l.b16 %v110
    %v164 = vunpack.c.h.b16 %v110
    %v165 = vunpack.c.l.b16 %v111
    %v166 = vunpack.c.h.b16 %v111
    %v167 = vunpack.c.l.b16 %v112
    %v168 = vunpack.c.h.b16 %v112
    %v169 = vunpack.c.l.b16 %v113
    %v170 = vunpack.c.h.b16 %v113
    %v171 = vunpack.c.l.b16 %v114
    %v172 = vunpack.c.h.b16 %v114
    %v173 = vunpack.c.l.b16 %v115
    %v174 = vunpack.c.h.b16 %v115
    %v175 = vunpack.c.l.b16 %v116
    %v176 = vunpack.c.h.b16 %v116
    %v177 = vpack.c.b16 %v147, %v145
    %v178 = vpack.c.b16 %v148, %v146
    %v179 = vpack.c.b16 %v151, %v149
    %v180 = vpack.c.b16 %v152, %v150
    %v181 = vpack.c.b16 %v155, %v153
    %v182 = vpack.c.b16 %v156, %v154
    %v183 = vpack.c.b16 %v159, %v157
    %v184 = vpack.c.b16 %v160, %v158
    %v185 = vpack.c.b16 %v163, %v161
    %v186 = vpack.c.b16 %v164, %v162
    %v187 = vpack.c.b16 %v167, %v165
    %v188 = vpack.c.b16 %v168, %v166
    %v189 = vpack.c.b16 %v171, %v169
    %v190 = vpack.c.b16 %v172, %v170
    %v191 = vpack.c.b16 %v175, %v173
    %v192 = vpack.c.b16 %v176, %v174
    %209 = vmatprep.subr.bf16.mxu0 %v192
    %210 = vmatpush1.bf16.msra.mxu0 %v191
    %211 = vmatprep.subr.bf16.mxu0 %v190
    %212 = vmatpush1.bf16.msra.mxu0 %v189
    %213 = vmatprep.subr.bf16.mxu0 %v188
    %214 = vmatpush1.bf16.msra.mxu0 %v187
    %215 = vmatprep.subr.bf16.mxu0 %v186
    %216 = vmatpush1.bf16.msra.mxu0 %v185
    %217 = vmatprep.subr.bf16.mxu0 %v184
    %218 = vmatpush1.bf16.msra.mxu0 %v183
    %219 = vmatprep.subr.bf16.mxu0 %v182
    %220 = vmatpush1.bf16.msra.mxu0 %v181
    %221 = vmatprep.subr.bf16.mxu0 %v180
    %222 = vmatpush1.bf16.msra.mxu0 %v179
    %223 = vmatprep.subr.bf16.mxu0 %v178
    %224 = vmatpush1.bf16.msra.mxu0 %v177
    %225 = vmatprep.subr.bf16.mxu0 0
    %226 = vmatpush2.bf16.msra.mxu0 0
    %227 = vmatprep.subr.bf16.mxu0 0
    %228 = vmatpush2.bf16.msra.mxu0 0
    %229 = vmatprep.subr.bf16.mxu0 0
    %230 = vmatpush2.bf16.msra.mxu0 0
    %231 = vmatprep.subr.bf16.mxu0 0
    %232 = vmatpush2.bf16.msra.mxu0 0
    %233 = vmatprep.subr.bf16.mxu0 0
    %234 = vmatpush2.bf16.msra.mxu0 0
    %235 = vmatprep.subr.bf16.mxu0 0
    %236 = vmatpush2.bf16.msra.mxu0 0
    %237 = vmatprep.subr.bf16.mxu0 0
    %238 = vmatpush2.bf16.msra.mxu0 0
    %239 = vmatprep.subr.bf16.mxu0 0
    %240 = vmatpush2.bf16.msra.mxu0 0
    %241 = vmatprep.mubr.bf16.mxu0 0
    %242 = vmatmul.mubr.bf16.gmra.mxu0 %v100
    %v243 = vpop.f32.mrf.mxu0
    %v244 = vadd.f32 %v122, %v243
    %v245 = vpop.f32.mrf.mxu0
    %v246 = vadd.f32 %v126, %v245
    %v247 = vpop.f32.mrf.mxu0
    %v248 = vpop.f32.mrf.mxu0
    %249 = vdwg.mxu0
    %vm250 = vcmp.gt.f32.partialorder %v244, 0.0
    %vm251 = vcmp.gt.f32.partialorder %v246, 0.0
    %v252 = vmul.f32 %v244, 0.01
    %v253 = vmul.f32 %v246, 0.01
    %v254 = vsel %vm250, %v244, %v252
    %v255 = vsel %vm251, %v246, %v253
    %v256 = vpack.c.bf16 %v254, %v254
    %v257 = vpack.c.bf16 %v255, %v255
    %v258 = vld [vmem:[#allocation7] sm:$0xff]
    %v259 = vld [vmem:[#allocation7 + $0x8] sm:$0xff]
    %v260 = vld [vmem:[#allocation7 + $0x10] sm:$0xff]
    %v261 = vld [vmem:[#allocation7 + $0x18] sm:$0xff]
    %v262 = vld [vmem:[#allocation7 + $0x20] sm:$0xff]
    %v263 = vld [vmem:[#allocation7 + $0x28] sm:$0xff]
    %v264 = vld [vmem:[#allocation7 + $0x30] sm:$0xff]
    %v265 = vld [vmem:[#allocation7 + $0x38] sm:$0xff]
    %v266 = vld [vmem:[#allocation7 + $0x40] sm:$0xff]
    %v267 = vld [vmem:[#allocation7 + $0x48] sm:$0xff]
    %v268 = vld [vmem:[#allocation7 + $0x50] sm:$0xff]
    %v269 = vld [vmem:[#allocation7 + $0x58] sm:$0xff]
    %v270 = vld [vmem:[#allocation7 + $0x60] sm:$0xff]
    %v271 = vld [vmem:[#allocation7 + $0x68] sm:$0xff]
    %v272 = vld [vmem:[#allocation7 + $0x70] sm:$0xff]
    %v273 = vld [vmem:[#allocation7 + $0x78] sm:$0xff]
    %v274 = vld [vmem:[#allocation7 + $0x80] sm:$0xff]
    %v275 = vld [vmem:[#allocation7 + $0x88] sm:$0xff]
    %v276 = vld [vmem:[#allocation7 + $0x90] sm:$0xff]
    %v277 = vld [vmem:[#allocation7 + $0x98] sm:$0xff]
    %v278 = vld [vmem:[#allocation7 + $0xa0] sm:$0xff]
    %v279 = vld [vmem:[#allocation7 + $0xa8] sm:$0xff]
    %v280 = vld [vmem:[#allocation7 + $0xb0] sm:$0xff]
    %v281 = vld [vmem:[#allocation7 + $0xb8] sm:$0xff]
    %v282 = vld [vmem:[#allocation7 + $0xc0] sm:$0xff]
    %v283 = vld [vmem:[#allocation7 + $0xc8] sm:$0xff]
    %v284 = vld [vmem:[#allocation7 + $0xd0] sm:$0xff]
    %v285 = vld [vmem:[#allocation7 + $0xd8] sm:$0xff]
    %v286 = vld [vmem:[#allocation7 + $0xe0] sm:$0xff]
    %v287 = vld [vmem:[#allocation7 + $0xe8] sm:$0xff]
    %v288 = vld [vmem:[#allocation7 + $0xf0] sm:$0xff]
    %v289 = vld [vmem:[#allocation7 + $0xf8] sm:$0xff]
    %v290 = vld [vmem:[%s4] sm:$0x3]
    %v292 = vlaneseq
    %v293 = vshrl.u32 %v292, 7
    %v294 = vsub.s32 0, %v293
    %v295 = vrot.slane %v290, %v294
    %v296 = vlaneseq
    %v297 = vshrl.u32 %v296, 7
    %v298 = vsub.s32 1, %v297
    %v299 = vrot.slane %v290, %v298
    %v334 = vunpack.c.l.b16 %v258
    %v335 = vunpack.c.h.b16 %v258
    %v336 = vunpack.c.l.b16 %v259
    %v337 = vunpack.c.h.b16 %v259
    %v338 = vunpack.c.l.b16 %v260
    %v339 = vunpack.c.h.b16 %v260
    %v340 = vunpack.c.l.b16 %v261
    %v341 = vunpack.c.h.b16 %v261
    %v342 = vunpack.c.l.b16 %v262
    %v343 = vunpack.c.h.b16 %v262
    %v344 = vunpack.c.l.b16 %v263
    %v345 = vunpack.c.h.b16 %v263
    %v346 = vunpack.c.l.b16 %v264
    %v347 = vunpack.c.h.b16 %v264
    %v348 = vunpack.c.l.b16 %v265
    %v349 = vunpack.c.h.b16 %v265
    %v350 = vunpack.c.l.b16 %v266
    %v351 = vunpack.c.h.b16 %v266
    %v352 = vunpack.c.l.b16 %v267
    %v353 = vunpack.c.h.b16 %v267
    %v354 = vunpack.c.l.b16 %v268
    %v355 = vunpack.c.h.b16 %v268
    %v356 = vunpack.c.l.b16 %v269
    %v357 = vunpack.c.h.b16 %v269
    %v358 = vunpack.c.l.b16 %v270
    %v359 = vunpack.c.h.b16 %v270
    %v360 = vunpack.c.l.b16 %v271
    %v361 = vunpack.c.h.b16 %v271
    %v362 = vunpack.c.l.b16 %v272
    %v363 = vunpack.c.h.b16 %v272
    %v364 = vunpack.c.l.b16 %v273
    %v365 = vunpack.c.h.b16 %v273
    %v366 = vunpack.c.l.b16 %v274
    %v367 = vunpack.c.h.b16 %v274
    %v368 = vunpack.c.l.b16 %v275
    %v369 = vunpack.c.h.b16 %v275
    %v370 = vunpack.c.l.b16 %v276
    %v371 = vunpack.c.h.b16 %v276
    %v372 = vunpack.c.l.b16 %v277
    %v373 = vunpack.c.h.b16 %v277
    %v374 = vunpack.c.l.b16 %v278
    %v375 = vunpack.c.h.b16 %v278
    %v376 = vunpack.c.l.b16 %v279
    %v377 = vunpack.c.h.b16 %v279
    %v378 = vunpack.c.l.b16 %v280
    %v379 = vunpack.c.h.b16 %v280
    %v380 = vunpack.c.l.b16 %v281
    %v381 = vunpack.c.h.b16 %v281
    %v382 = vunpack.c.l.b16 %v282
    %v383 = vunpack.c.h.b16 %v282
    %v384 = vunpack.c.l.b16 %v283
    %v385 = vunpack.c.h.b16 %v283
    %v386 = vunpack.c.l.b16 %v284
    %v387 = vunpack.c.h.b16 %v284
    %v388 = vunpack.c.l.b16 %v285
    %v389 = vunpack.c.h.b16 %v285
    %v390 = vunpack.c.l.b16 %v286
    %v391 = vunpack.c.h.b16 %v286
    %v392 = vunpack.c.l.b16 %v287
    %v393 = vunpack.c.h.b16 %v287
    %v394 = vunpack.c.l.b16 %v288
    %v395 = vunpack.c.h.b16 %v288
    %v396 = vunpack.c.l.b16 %v289
    %v397 = vunpack.c.h.b16 %v289
    %v398 = vpack.c.b16 %v336, %v334
    %v399 = vpack.c.b16 %v337, %v335
    %v400 = vpack.c.b16 %v340, %v338
    %v401 = vpack.c.b16 %v341, %v339
    %v402 = vpack.c.b16 %v344, %v342
    %v403 = vpack.c.b16 %v345, %v343
    %v404 = vpack.c.b16 %v348, %v346
    %v405 = vpack.c.b16 %v349, %v347
    %v406 = vpack.c.b16 %v352, %v350
    %v407 = vpack.c.b16 %v353, %v351
    %v408 = vpack.c.b16 %v356, %v354
    %v409 = vpack.c.b16 %v357, %v355
    %v410 = vpack.c.b16 %v360, %v358
    %v411 = vpack.c.b16 %v361, %v359
    %v412 = vpack.c.b16 %v364, %v362
    %v413 = vpack.c.b16 %v365, %v363
    %v414 = vpack.c.b16 %v368, %v366
    %v415 = vpack.c.b16 %v369, %v367
    %v416 = vpack.c.b16 %v372, %v370
    %v417 = vpack.c.b16 %v373, %v371
    %v418 = vpack.c.b16 %v376, %v374
    %v419 = vpack.c.b16 %v377, %v375
    %v420 = vpack.c.b16 %v380, %v378
    %v421 = vpack.c.b16 %v381, %v379
    %v422 = vpack.c.b16 %v384, %v382
    %v423 = vpack.c.b16 %v385, %v383
    %v424 = vpack.c.b16 %v388, %v386
    %v425 = vpack.c.b16 %v389, %v387
    %v426 = vpack.c.b16 %v392, %v390
    %v427 = vpack.c.b16 %v393, %v391
    %v428 = vpack.c.b16 %v396, %v394
    %v429 = vpack.c.b16 %v397, %v395
    %462 = vmatprep.subr.bf16.mxu0 %v413
    %463 = vmatpush1.bf16.msra.mxu0 %v412
    %464 = vmatprep.subr.bf16.mxu0 %v411
    %465 = vmatpush1.bf16.msra.mxu0 %v410
    %466 = vmatprep.subr.bf16.mxu0 %v409
    %467 = vmatpush1.bf16.msra.mxu0 %v408
    %468 = vmatprep.subr.bf16.mxu0 %v407
    %469 = vmatpush1.bf16.msra.mxu0 %v406
    %470 = vmatprep.subr.bf16.mxu0 %v405
    %471 = vmatpush1.bf16.msra.mxu0 %v404
    %472 = vmatprep.subr.bf16.mxu0 %v403
    %473 = vmatpush1.bf16.msra.mxu0 %v402
    %474 = vmatprep.subr.bf16.mxu0 %v401
    %475 = vmatpush1.bf16.msra.mxu0 %v400
    %476 = vmatprep.subr.bf16.mxu0 %v399
    %477 = vmatpush1.bf16.msra.mxu0 %v398
    %478 = vmatprep.subr.bf16.mxu0 %v429
    %479 = vmatpush2.bf16.msra.mxu0 %v428
    %480 = vmatprep.subr.bf16.mxu0 %v427
    %481 = vmatpush2.bf16.msra.mxu0 %v426
    %482 = vmatprep.subr.bf16.mxu0 %v425
    %483 = vmatpush2.bf16.msra.mxu0 %v424
    %484 = vmatprep.subr.bf16.mxu0 %v423
    %485 = vmatpush2.bf16.msra.mxu0 %v422
    %486 = vmatprep.subr.bf16.mxu0 %v421
    %487 = vmatpush2.bf16.msra.mxu0 %v420
    %488 = vmatprep.subr.bf16.mxu0 %v419
    %489 = vmatpush2.bf16.msra.mxu0 %v418
    %490 = vmatprep.subr.bf16.mxu0 %v417
    %491 = vmatpush2.bf16.msra.mxu0 %v416
    %492 = vmatprep.subr.bf16.mxu0 %v415
    %493 = vmatpush2.bf16.msra.mxu0 %v414
    %494 = vmatprep.mubr.bf16.mxu0 %v257
    %495 = vmatmul.mubr.bf16.gmra.mxu0 %v256
    %v496 = vpop.f32.mrf.mxu0
    %v497 = vadd.f32 %v295, %v496
    %v498 = vpop.f32.mrf.mxu0
    %v499 = vadd.f32 %v299, %v498
    %v500 = vpop.f32.mrf.mxu0
    %v501 = vpop.f32.mrf.mxu0
    %502 = vdwg.mxu0
    %vm503 = vcmp.gt.f32.partialorder %v497, 0.0
    %vm504 = vcmp.gt.f32.partialorder %v499, 0.0
    %v505 = vmul.f32 %v497, 0.01
    %v506 = vmul.f32 %v499, 0.01
    %v507 = vsel %vm503, %v497, %v505
    %v508 = vsel %vm504, %v499, %v506
    %v509 = vpack.c.bf16 %v507, %v507
    %v510 = vpack.c.bf16 %v508, %v508
    %v511 = vld [vmem:[#allocation8] sm:$0xf]
    %v512 = vld [vmem:[#allocation8 + $0x4] sm:$0xf]
    %v513 = vld [vmem:[#allocation8 + $0x8] sm:$0xf]
    %v514 = vld [vmem:[#allocation8 + $0xc] sm:$0xf]
    %v515 = vld [vmem:[#allocation8 + $0x10] sm:$0xf]
    %v516 = vld [vmem:[#allocation8 + $0x14] sm:$0xf]
    %v517 = vld [vmem:[#allocation8 + $0x18] sm:$0xf]
    %v518 = vld [vmem:[#allocation8 + $0x1c] sm:$0xf]
    %v519 = vld [vmem:[#allocation8 + $0x20] sm:$0xf]
    %v520 = vld [vmem:[#allocation8 + $0x24] sm:$0xf]
    %v521 = vld [vmem:[#allocation8 + $0x28] sm:$0xf]
    %v522 = vld [vmem:[#allocation8 + $0x2c] sm:$0xf]
    %v523 = vld [vmem:[#allocation8 + $0x30] sm:$0xf]
    %v524 = vld [vmem:[#allocation8 + $0x34] sm:$0xf]
    %v525 = vld [vmem:[#allocation8 + $0x38] sm:$0xf]
    %v526 = vld [vmem:[#allocation8 + $0x3c] sm:$0xf]
    %v527 = vld [vmem:[#allocation8 + $0x40] sm:$0xf]
    %v528 = vld [vmem:[#allocation8 + $0x44] sm:$0xf]
    %v529 = vld [vmem:[#allocation8 + $0x48] sm:$0xf]
    %v530 = vld [vmem:[#allocation8 + $0x4c] sm:$0xf]
    %v531 = vld [vmem:[#allocation8 + $0x50] sm:$0xf]
    %v532 = vld [vmem:[#allocation8 + $0x54] sm:$0xf]
    %v533 = vld [vmem:[#allocation8 + $0x58] sm:$0xf]
    %v534 = vld [vmem:[#allocation8 + $0x5c] sm:$0xf]
    %v535 = vld [vmem:[#allocation8 + $0x60] sm:$0xf]
    %v536 = vld [vmem:[#allocation8 + $0x64] sm:$0xf]
    %v537 = vld [vmem:[#allocation8 + $0x68] sm:$0xf]
    %v538 = vld [vmem:[#allocation8 + $0x6c] sm:$0xf]
    %v539 = vld [vmem:[#allocation8 + $0x70] sm:$0xf]
    %v540 = vld [vmem:[#allocation8 + $0x74] sm:$0xf]
    %v541 = vld [vmem:[#allocation8 + $0x78] sm:$0xf]
    %v542 = vld [vmem:[#allocation8 + $0x7c] sm:$0xf]
    %v543 = vld [vmem:[%s6] sm:$0x1]
    %v545 = vlaneseq
    %v546 = vshrl.u32 %v545, 7
    %v547 = vsub.s32 0, %v546
    %v548 = vrot.slane %v543, %v547
    %v582 = vunpack.c.l.b16 %v511
    %v583 = vunpack.c.l.b16 %v512
    %v584 = vunpack.c.l.b16 %v513
    %v585 = vunpack.c.l.b16 %v514
    %v586 = vunpack.c.l.b16 %v515
    %v587 = vunpack.c.l.b16 %v516
    %v588 = vunpack.c.l.b16 %v517
    %v589 = vunpack.c.l.b16 %v518
    %v590 = vunpack.c.l.b16 %v519
    %v591 = vunpack.c.l.b16 %v520
    %v592 = vunpack.c.l.b16 %v521
    %v593 = vunpack.c.l.b16 %v522
    %v594 = vunpack.c.l.b16 %v523
    %v595 = vunpack.c.l.b16 %v524
    %v596 = vunpack.c.l.b16 %v525
    %v597 = vunpack.c.l.b16 %v526
    %v598 = vunpack.c.l.b16 %v527
    %v599 = vunpack.c.l.b16 %v528
    %v600 = vunpack.c.l.b16 %v529
    %v601 = vunpack.c.l.b16 %v530
    %v602 = vunpack.c.l.b16 %v531
    %v603 = vunpack.c.l.b16 %v532
    %v604 = vunpack.c.l.b16 %v533
    %v605 = vunpack.c.l.b16 %v534
    %v606 = vunpack.c.l.b16 %v535
    %v607 = vunpack.c.l.b16 %v536
    %v608 = vunpack.c.l.b16 %v537
    %v609 = vunpack.c.l.b16 %v538
    %v610 = vunpack.c.l.b16 %v539
    %v611 = vunpack.c.l.b16 %v540
    %v612 = vunpack.c.l.b16 %v541
    %v613 = vunpack.c.l.b16 %v542
    %v614 = vpack.c.b16 %v583, %v582
    %v615 = vpack.c.b16 %v585, %v584
    %v616 = vpack.c.b16 %v587, %v586
    %v617 = vpack.c.b16 %v589, %v588
    %v618 = vpack.c.b16 %v591, %v590
    %v619 = vpack.c.b16 %v593, %v592
    %v620 = vpack.c.b16 %v595, %v594
    %v621 = vpack.c.b16 %v597, %v596
    %v622 = vpack.c.b16 %v599, %v598
    %v623 = vpack.c.b16 %v601, %v600
    %v624 = vpack.c.b16 %v603, %v602
    %v625 = vpack.c.b16 %v605, %v604
    %v626 = vpack.c.b16 %v607, %v606
    %v627 = vpack.c.b16 %v609, %v608
    %v628 = vpack.c.b16 %v611, %v610
    %v629 = vpack.c.b16 %v613, %v612
    %646 = vmatprep.subr.bf16.mxu0 0
    %647 = vmatpush1.bf16.msra.mxu0 %v621
    %648 = vmatprep.subr.bf16.mxu0 0
    %649 = vmatpush1.bf16.msra.mxu0 %v620
    %650 = vmatprep.subr.bf16.mxu0 0
    %651 = vmatpush1.bf16.msra.mxu0 %v619
    %652 = vmatprep.subr.bf16.mxu0 0
    %653 = vmatpush1.bf16.msra.mxu0 %v618
    %654 = vmatprep.subr.bf16.mxu0 0
    %655 = vmatpush1.bf16.msra.mxu0 %v617
    %656 = vmatprep.subr.bf16.mxu0 0
    %657 = vmatpush1.bf16.msra.mxu0 %v616
    %658 = vmatprep.subr.bf16.mxu0 0
    %659 = vmatpush1.bf16.msra.mxu0 %v615
    %660 = vmatprep.subr.bf16.mxu0 0
    %661 = vmatpush1.bf16.msra.mxu0 %v614
    %662 = vmatprep.subr.bf16.mxu0 0
    %663 = vmatpush2.bf16.msra.mxu0 %v629
    %664 = vmatprep.subr.bf16.mxu0 0
    %665 = vmatpush2.bf16.msra.mxu0 %v628
    %666 = vmatprep.subr.bf16.mxu0 0
    %667 = vmatpush2.bf16.msra.mxu0 %v627
    %668 = vmatprep.subr.bf16.mxu0 0
    %669 = vmatpush2.bf16.msra.mxu0 %v626
    %670 = vmatprep.subr.bf16.mxu0 0
    %671 = vmatpush2.bf16.msra.mxu0 %v625
    %672 = vmatprep.subr.bf16.mxu0 0
    %673 = vmatpush2.bf16.msra.mxu0 %v624
    %674 = vmatprep.subr.bf16.mxu0 0
    %675 = vmatpush2.bf16.msra.mxu0 %v623
    %676 = vmatprep.subr.bf16.mxu0 0
    %677 = vmatpush2.bf16.msra.mxu0 %v622
    %678 = vmatprep.mubr.bf16.mxu0 %v510
    %679 = vmatmul.mubr.bf16.gmra.mxu0 %v509
    %v680 = vpop.f32.mrf.mxu0
    %v681 = vadd.f32 %v548, %v680
    %v682 = vpop.f32.mrf.mxu0
    %v683 = vpop.f32.mrf.mxu0
    %v684 = vpop.f32.mrf.mxu0
    %685 = vdwg.mxu0
    %vm686 = vcmp.gt.f32.partialorder %v681, 0.0
    %v687 = vmul.f32 %v681, 0.01
    %v688 = vsel %vm686, %v681, %v687
    %v689 = vpack.c.bf16 %v688, %v688
    %v690 = vld [vmem:[#allocation10] sm:$0xf]
    %v691 = vld [vmem:[#allocation10 + $0x4] sm:$0xf]
    %v692 = vld [vmem:[#allocation10 + $0x8] sm:$0xf]
    %v693 = vld [vmem:[#allocation10 + $0xc] sm:$0xf]
    %v694 = vld [vmem:[#allocation10 + $0x10] sm:$0xf]
    %v695 = vld [vmem:[#allocation10 + $0x14] sm:$0xf]
    %v696 = vld [vmem:[#allocation10 + $0x18] sm:$0xf]
    %v697 = vld [vmem:[#allocation10 + $0x1c] sm:$0xf]
    %v698 = vld [vmem:[#allocation10 + $0x20] sm:$0xf]
    %v699 = vld [vmem:[#allocation10 + $0x24] sm:$0xf]
    %v700 = vld [vmem:[#allocation10 + $0x28] sm:$0xf]
    %v701 = vld [vmem:[#allocation10 + $0x2c] sm:$0xf]
    %v702 = vld [vmem:[#allocation10 + $0x30] sm:$0xf]
    %v703 = vld [vmem:[#allocation10 + $0x34] sm:$0xf]
    %v704 = vld [vmem:[#allocation10 + $0x38] sm:$0xf]
    %v705 = vld [vmem:[#allocation10 + $0x3c] sm:$0xf]
    %v706 = vld [vmem:[%s8] sm:$0x1]
    %v708 = vlaneseq
    %v709 = vshrl.u32 %v708, 7
    %v710 = vsub.s32 0, %v709
    %v711 = vrot.slane %v706, %v710
    %v729 = vunpack.c.l.b16 %v690
    %v730 = vunpack.c.l.b16 %v691
    %v731 = vunpack.c.l.b16 %v692
    %v732 = vunpack.c.l.b16 %v693
    %v733 = vunpack.c.l.b16 %v694
    %v734 = vunpack.c.l.b16 %v695
    %v735 = vunpack.c.l.b16 %v696
    %v736 = vunpack.c.l.b16 %v697
    %v737 = vunpack.c.l.b16 %v698
    %v738 = vunpack.c.l.b16 %v699
    %v739 = vunpack.c.l.b16 %v700
    %v740 = vunpack.c.l.b16 %v701
    %v741 = vunpack.c.l.b16 %v702
    %v742 = vunpack.c.l.b16 %v703
    %v743 = vunpack.c.l.b16 %v704
    %v744 = vunpack.c.l.b16 %v705
    %v745 = vpack.c.b16 %v730, %v729
    %v746 = vpack.c.b16 %v732, %v731
    %v747 = vpack.c.b16 %v734, %v733
    %v748 = vpack.c.b16 %v736, %v735
    %v749 = vpack.c.b16 %v738, %v737
    %v750 = vpack.c.b16 %v740, %v739
    %v751 = vpack.c.b16 %v742, %v741
    %v752 = vpack.c.b16 %v744, %v743
    %761 = vmatprep.subr.bf16.mxu0 0
    %762 = vmatpush1.bf16.msra.mxu0 %v752
    %763 = vmatprep.subr.bf16.mxu0 0
    %764 = vmatpush1.bf16.msra.mxu0 %v751
    %765 = vmatprep.subr.bf16.mxu0 0
    %766 = vmatpush1.bf16.msra.mxu0 %v750
    %767 = vmatprep.subr.bf16.mxu0 0
    %768 = vmatpush1.bf16.msra.mxu0 %v749
    %769 = vmatprep.subr.bf16.mxu0 0
    %770 = vmatpush1.bf16.msra.mxu0 %v748
    %771 = vmatprep.subr.bf16.mxu0 0
    %772 = vmatpush1.bf16.msra.mxu0 %v747
    %773 = vmatprep.subr.bf16.mxu0 0
    %774 = vmatpush1.bf16.msra.mxu0 %v746
    %775 = vmatprep.subr.bf16.mxu0 0
    %776 = vmatpush1.bf16.msra.mxu0 %v745
    %777 = vmatprep.subr.bf16.mxu0 0
    %778 = vmatpush2.bf16.msra.mxu0 0
    %779 = vmatprep.subr.bf16.mxu0 0
    %780 = vmatpush2.bf16.msra.mxu0 0
    %781 = vmatprep.subr.bf16.mxu0 0
    %782 = vmatpush2.bf16.msra.mxu0 0
    %783 = vmatprep.subr.bf16.mxu0 0
    %784 = vmatpush2.bf16.msra.mxu0 0
    %785 = vmatprep.subr.bf16.mxu0 0
    %786 = vmatpush2.bf16.msra.mxu0 0
    %787 = vmatprep.subr.bf16.mxu0 0
    %788 = vmatpush2.bf16.msra.mxu0 0
    %789 = vmatprep.subr.bf16.mxu0 0
    %790 = vmatpush2.bf16.msra.mxu0 0
    %791 = vmatprep.subr.bf16.mxu0 0
    %792 = vmatpush2.bf16.msra.mxu0 0
    %793 = vmatprep.mubr.bf16.mxu0 0
    %794 = vmatmul.mubr.bf16.gmra.mxu0 %v689
    %v795 = vpop.f32.mrf.mxu0
    %v796 = vadd.f32 %v711, %v795
    %v797 = vpop.f32.mrf.mxu0
    %v798 = vpop.f32.mrf.mxu0
    %v799 = vpop.f32.mrf.mxu0
    %800 = vdwg.mxu0
    %v801 = vpack.c.bf16 %v796, %v796
    %802 = vst [vmem:[#allocation11] sm:$0xf] %v801
    // Predicated region
    $region58: #{tpu_custom_call.1} parent=1 // pred_check
      _
    $region59: #{tpu_custom_call.1} parent=1 // pred_check_branch
      %804 = sbr.rel (0) target = $region61
    $region60: #{tpu_custom_call.1} parent=1 // pred_region
      %s806 = ssub.s32 64, 64
      %807 = vsyncadd [#allocation4], %s806
      %s809 = sshll.u32 [#allocation11], 4
      %s810 = int_to_ptr.vmem [resolvable:$true] %s809
      %812 = dma.vmem_to_hbm [thread:$0]  %s810, 64, %s9, [#allocation4]
    $region61: #{tpu_custom_call.1} parent=1 // pred_fallthru
      _
    // Predicated region
    $region62: #{tpu_custom_call.1} parent=1 // pred_check
      _
    $region63: #{tpu_custom_call.1} parent=1 // pred_check_branch
      %814 = sbr.rel (0) target = $region65
    $region64: #{tpu_custom_call.1} parent=1 // pred_region
      %815 = dma.done [#allocation4], 64
    $region65: #{tpu_custom_call.1} parent=1 // pred_fallthru
      _
    %816 = vsyncpa [#allocation3], 1
    %817 = vsyncpa [#allocation6], 1
    %818 = vsyncpa [#allocation9], 1
    %819 = vsyncpa [#allocation4], 1

</llo_original>
